<compile_context>
chip_gen: v5e
topology: v5e:2x2
jax: 0.10.0
libtpu: 0.0.40
codegen_flags: <defaults>
</compile_context>

<pallas_src>
import jax
import jax.numpy as jnp
from jax import lax
from jax.experimental import pallas as pl
from jax.experimental.pallas import tpu as pltpu


def _make_lstm_seq_kernel(T, B, E, Cp):
    """Builds the whole-sequence kernel for static (T, B, E, padded classes)."""

    def kernel(xs_ref, wih_ref, bias_ref, whh_ref, wlin_ref, blin_ref,
               p_ref, pre_sc, hs_sc):
        # ---- Input projection for ALL timesteps: one lane-dense matmul. ----
        # (T*B, E) x (E, 4E) + (1, 4E)  ->  pre-gate slab in VMEM scratch.
        pre_sc[...] = (
            jnp.dot(xs_ref[...], wih_ref[...],
                    preferred_element_type=jnp.float32)
            + bias_ref[...])

        whh = whh_ref[...]                        # (E, 4E), loop-invariant

        # Lane mask selecting the tanh ("g") gate lanes; hoisted out of the
        # loop (JAX does not CSE broadcast_in_dim).
        lane = lax.broadcasted_iota(jnp.int32, (B, 4 * E), 1)
        is_g = (lane >= 2 * E) & (lane < 3 * E)

        def step(t, carry):
            h, c = carry
            row = pl.multiple_of(t * B, B)
            # ONE fused (B, E) x (E, 4E) MXU matmul on the serial path.
            gates = pre_sc[pl.ds(row, B), :] + jnp.dot(
                h, whh, preferred_element_type=jnp.float32)
            # ONE sigmoid + ONE tanh over the full (B, 4E) vreg + VPU select.
            act = jnp.where(is_g, jnp.tanh(gates), jax.nn.sigmoid(gates))
            # PyTorch LSTMCell gate order: i, f, g, o (static 32-lane slices).
            i_g = act[:, 0 * E:1 * E]
            f_g = act[:, 1 * E:2 * E]
            g_g = act[:, 2 * E:3 * E]
            o_g = act[:, 3 * E:4 * E]
            c_new = f_g * c + i_g * g_g
            h_new = o_g * jnp.tanh(c_new)
            hs_sc[pl.ds(row, B), :] = h_new
            return h_new, c_new

        # nn.LSTMCell with no (h, c) provided starts from zeros.
        h0 = jnp.zeros((B, E), jnp.float32)
        c0 = jnp.zeros((B, E), jnp.float32)
        # TODO(synk): for long sequences switch to a partial unroll (4 or 8).
        lax.fori_loop(0, T, step, (h0, c0), unroll=True)

        # ---- Classifier + softmax on all T*B rows; lane-dense store. ----
        logits = (jnp.dot(hs_sc[...], wlin_ref[...],
                          preferred_element_type=jnp.float32) + blin_ref[...])
        m = jnp.max(logits, axis=-1, keepdims=True)
        e = jnp.exp(logits - m)
        inv = pl.reciprocal(jnp.sum(e, axis=-1, keepdims=True), approx=False)
        p_ref[...] = (e * inv).astype(p_ref.dtype)

    return kernel


def model_forward(xs, w_ih, w_hh, b_ih, b_hh, w_lin, b_lin):
    """xs: (T, B, E) float32. Returns ps: (T, B, C) float32 softmax probs."""
    T, B, E = xs.shape
    C = w_lin.shape[0]
    Cp = ((C + 127) // 128) * 128 or 128          # lane-dense class axis

    xs_flat = xs.reshape(T * B, E).astype(jnp.float32)
    wih_t = jnp.transpose(w_ih).astype(jnp.float32)          # (E, 4E)
    whh_t = jnp.transpose(w_hh).astype(jnp.float32)          # (E, 4E)
    bias = (b_ih + b_hh).astype(jnp.float32).reshape(1, 4 * E)

    # Classifier padded to 128 lanes; padded classes get a hugely negative
    # bias so their softmax probability is exactly 0.
    wlin_t = jnp.zeros((E, Cp), jnp.float32).at[:, :C].set(
        jnp.transpose(w_lin).astype(jnp.float32))
    blin = jnp.full((1, Cp), -1e30, jnp.float32).at[0, :C].set(
        b_lin.astype(jnp.float32))

    kernel = _make_lstm_seq_kernel(T, B, E, Cp)
    probs_pad = pl.pallas_call(
        kernel,
        out_shape=jax.ShapeDtypeStruct((T * B, Cp), jnp.float32),
        scratch_shapes=[
            pltpu.VMEM((T * B, 4 * E), jnp.float32),   # pre-gate slab
            pltpu.VMEM((T * B, E), jnp.float32),       # hidden-state slab
        ],
    )(xs_flat, wih_t, bias, whh_t, wlin_t, blin)

    return probs_pad[:, :C].reshape(T, B, C)


def _reference(xs, w_ih, w_hh, b_ih, b_hh, w_lin, b_lin):
    """Pure-JAX reference reproducing nn.LSTMCell + nn.Linear + softmax."""
    hp = jax.lax.Precision.HIGHEST
    T, B, E = xs.shape
    h = jnp.zeros((B, E), jnp.float32)
    c = jnp.zeros((B, E), jnp.float32)
    ps = []
    for t in range(T):
        gates = (jnp.dot(xs[t], w_ih.T, precision=hp) + b_ih
                 + jnp.dot(h, w_hh.T, precision=hp) + b_hh)
        i = jax.nn.sigmoid(gates[:, 0 * E:1 * E])
        f = jax.nn.sigmoid(gates[:, 1 * E:2 * E])
        g = jnp.tanh(gates[:, 2 * E:3 * E])
        o = jax.nn.sigmoid(gates[:, 3 * E:4 * E])
        c = f * c + i * g
        h = o * jnp.tanh(c)
        logits = jnp.dot(h, w_lin.T, precision=hp) + b_lin
        ps.append(jax.nn.softmax(logits, axis=-1))
    return jnp.stack(ps)


if __name__ == "__main__":
    # Small deterministic problem: T=4 graph snapshots, B=8 graphs per batch,
    # emb_dim=32, n_class=8.
    T, B, E, C = 4, 8, 32, 8

    key = jax.random.PRNGKey(0)
    ks = jax.random.split(key, 7)
    xs = jax.random.normal(ks[0], (T, B, E), jnp.float32)        # ARGCN outputs
    scale = 1.0 / jnp.sqrt(E)
    w_ih = jax.random.uniform(ks[1], (4 * E, E), jnp.float32, -scale, scale)
    w_hh = jax.random.uniform(ks[2], (4 * E, E), jnp.float32, -scale, scale)
    b_ih = jax.random.uniform(ks[3], (4 * E,), jnp.float32, -scale, scale)
    b_hh = jax.random.uniform(ks[4], (4 * E,), jnp.float32, -scale, scale)
    w_lin = jax.random.uniform(ks[5], (C, E), jnp.float32, -scale, scale)
    b_lin = jax.random.uniform(ks[6], (C,), jnp.float32, -scale, scale)

    ps = model_forward(xs, w_ih, w_hh, b_ih, b_hh, w_lin, b_lin)
    ps = jax.block_until_ready(ps)

    ref = _reference(xs, w_ih, w_hh, b_ih, b_hh, w_lin, b_lin)
    assert ps.shape == (T, B, C)
    assert jnp.allclose(ps, ref, atol=1e-4, rtol=1e-4), "mismatch vs reference"

    print("KERNEL_OK")
</pallas_src>

<mosaic_0001>
module attributes {stable_mosaic.version = 11 : i64} {
  func.func @kernel(%arg0: memref<32x32xf32, #tpu.memory_space<vmem>>, %arg1: memref<32x128xf32, #tpu.memory_space<vmem>>, %arg2: memref<1x128xf32, #tpu.memory_space<vmem>>, %arg3: memref<32x128xf32, #tpu.memory_space<vmem>>, %arg4: memref<32x128xf32, #tpu.memory_space<vmem>>, %arg5: memref<1x128xf32, #tpu.memory_space<vmem>>, %arg6: memref<32x128xf32, #tpu.memory_space<vmem>>, %arg7: memref<32x128xf32, #tpu.memory_space<vmem>>, %arg8: memref<32x32xf32, #tpu.memory_space<vmem>>) attributes {dimension_semantics = [], scalar_prefetch = 0 : i64, scratch_operands = 2 : i64, tpu.core_type = #tpu.core_type<tc>} {
    %c0 = arith.constant 0 : index
    %c0_0 = arith.constant 0 : index
    %0 = vector.load %arg0[%c0, %c0_0] : memref<32x32xf32, #tpu.memory_space<vmem>>, vector<32x32xf32>
    %c0_1 = arith.constant 0 : index
    %c0_2 = arith.constant 0 : index
    %1 = vector.load %arg1[%c0_1, %c0_2] : memref<32x128xf32, #tpu.memory_space<vmem>>, vector<32x128xf32>
    %cst = arith.constant dense<0.000000e+00> : vector<32x128xf32>
    %2 = tpu.matmul %0, %1, %cst {dimension_numbers = #tpu.dot_dimension_numbers<[1], [0], [0], [1], [0, 0, 1, 1], [], []>} : vector<32x32xf32>, vector<32x128xf32>, vector<32x128xf32> -> vector<32x128xf32>
    %c0_3 = arith.constant 0 : index
    %c0_4 = arith.constant 0 : index
    %3 = vector.load %arg2[%c0_3, %c0_4] : memref<1x128xf32, #tpu.memory_space<vmem>>, vector<1x128xf32>
    %4 = vector.broadcast %3 : vector<1x128xf32> to vector<32x128xf32>
    %5 = arith.addf %2, %4 : vector<32x128xf32>
    %c0_5 = arith.constant 0 : index
    %c0_6 = arith.constant 0 : index
    %6 = vector.load %arg7[%c0_5, %c0_6] : memref<32x128xf32, #tpu.memory_space<vmem>>, vector<32x128xf32>
    tpu.vector_store %arg7[%c0_5, %c0_6], %5 {strides = array<i32>} : memref<32x128xf32, #tpu.memory_space<vmem>>, vector<32x128xf32>,
    %c0_7 = arith.constant 0 : index
    %c0_8 = arith.constant 0 : index
    %7 = vector.load %arg3[%c0_7, %c0_8] : memref<32x128xf32, #tpu.memory_space<vmem>>, vector<32x128xf32>
    %8 = tpu.iota {dimensions = array<i32: 1>} : vector<8x128xi32>
    %c64_i32 = arith.constant 64 : i32
    %9 = vector.broadcast %c64_i32 : i32 to vector<8x128xi32>
    %10 = arith.cmpi sge, %8, %9 : vector<8x128xi32>
    %c96_i32 = arith.constant 96 : i32
    %11 = vector.broadcast %c96_i32 : i32 to vector<8x128xi32>
    %12 = arith.cmpi slt, %8, %11 : vector<8x128xi32>
    %13 = arith.andi %10, %12 : vector<8x128xi1>
    %cst_9 = arith.constant 0.000000e+00 : f32
    %14 = vector.broadcast %cst_9 : f32 to vector<8x32xf32>
    %cst_10 = arith.constant 0.000000e+00 : f32
    %15 = vector.broadcast %cst_10 : f32 to vector<8x32xf32>
    %c0_i32 = arith.constant 0 : i32
    %c8_i32 = arith.constant 8 : i32
    %16 = arith.muli %c0_i32, %c8_i32 : i32
    %17 = tpu.assume_multiple %16, 8 : i32
    %18 = arith.index_cast %17 : i32 to index
    %c0_11 = arith.constant 0 : index
    %19 = vector.load %arg7[%18, %c0_11] : memref<32x128xf32, #tpu.memory_space<vmem>>, vector<8x128xf32>
    %cst_12 = arith.constant dense<0.000000e+00> : vector<8x128xf32>
    %20 = tpu.matmul %14, %7, %cst_12 {dimension_numbers = #tpu.dot_dimension_numbers<[1], [0], [0], [1], [0, 0, 1, 1], [], []>} : vector<8x32xf32>, vector<32x128xf32>, vector<8x128xf32> -> vector<8x128xf32>
    %21 = arith.addf %19, %20 : vector<8x128xf32>
    %22 = math.tanh %21 : vector<8x128xf32>
    %23 = arith.negf %21 : vector<8x128xf32>
    %24 = math.exp %23 : vector<8x128xf32>
    %cst_13 = arith.constant 1.000000e+00 : f32
    %25 = vector.broadcast %cst_13 : f32 to vector<8x128xf32>
    %26 = arith.addf %25, %24 : vector<8x128xf32>
    %27 = arith.divf %25, %26 : vector<8x128xf32>
    %28 = arith.select %13, %22, %27 : vector<8x128xi1>, vector<8x128xf32>
    %29 = vector.extract_strided_slice %28 {offsets = [0, 0], sizes = [8, 32], strides = [1, 1]} : vector<8x128xf32> to vector<8x32xf32>
    %30 = vector.extract_strided_slice %28 {offsets = [0, 32], sizes = [8, 32], strides = [1, 1]} : vector<8x128xf32> to vector<8x32xf32>
    %31 = vector.extract_strided_slice %28 {offsets = [0, 64], sizes = [8, 32], strides = [1, 1]} : vector<8x128xf32> to vector<8x32xf32>
    %32 = vector.extract_strided_slice %28 {offsets = [0, 96], sizes = [8, 32], strides = [1, 1]} : vector<8x128xf32> to vector<8x32xf32>
    %33 = arith.mulf %30, %15 : vector<8x32xf32>
    %34 = arith.mulf %29, %31 : vector<8x32xf32>
    %35 = arith.addf %33, %34 : vector<8x32xf32>
    %36 = math.tanh %35 : vector<8x32xf32>
    %37 = arith.mulf %32, %36 : vector<8x32xf32>
    %38 = arith.index_cast %17 : i32 to index
    %c0_14 = arith.constant 0 : index
    %39 = vector.load %arg8[%38, %c0_14] : memref<32x32xf32, #tpu.memory_space<vmem>>, vector<8x32xf32>
    tpu.vector_store %arg8[%38, %c0_14], %37 {strides = array<i32>} : memref<32x32xf32, #tpu.memory_space<vmem>>, vector<8x32xf32>,
    %c1_i32 = arith.constant 1 : i32
    %c8_i32_15 = arith.constant 8 : i32
    %40 = arith.muli %c1_i32, %c8_i32_15 : i32
    %41 = tpu.assume_multiple %40, 8 : i32
    %42 = arith.index_cast %41 : i32 to index
    %c0_16 = arith.constant 0 : index
    %43 = vector.load %arg7[%42, %c0_16] : memref<32x128xf32, #tpu.memory_space<vmem>>, vector<8x128xf32>
    %cst_17 = arith.constant dense<0.000000e+00> : vector<8x128xf32>
    %44 = tpu.matmul %37, %7, %cst_17 {dimension_numbers = #tpu.dot_dimension_numbers<[1], [0], [0], [1], [0, 0, 1, 1], [], []>} : vector<8x32xf32>, vector<32x128xf32>, vector<8x128xf32> -> vector<8x128xf32>
    %45 = arith.addf %43, %44 : vector<8x128xf32>
    %46 = math.tanh %45 : vector<8x128xf32>
    %47 = arith.negf %45 : vector<8x128xf32>
    %48 = math.exp %47 : vector<8x128xf32>
    %cst_18 = arith.constant 1.000000e+00 : f32
    %49 = vector.broadcast %cst_18 : f32 to vector<8x128xf32>
    %50 = arith.addf %49, %48 : vector<8x128xf32>
    %51 = arith.divf %49, %50 : vector<8x128xf32>
    %52 = arith.select %13, %46, %51 : vector<8x128xi1>, vector<8x128xf32>
    %53 = vector.extract_strided_slice %52 {offsets = [0, 0], sizes = [8, 32], strides = [1, 1]} : vector<8x128xf32> to vector<8x32xf32>
    %54 = vector.extract_strided_slice %52 {offsets = [0, 32], sizes = [8, 32], strides = [1, 1]} : vector<8x128xf32> to vector<8x32xf32>
    %55 = vector.extract_strided_slice %52 {offsets = [0, 64], sizes = [8, 32], strides = [1, 1]} : vector<8x128xf32> to vector<8x32xf32>
    %56 = vector.extract_strided_slice %52 {offsets = [0, 96], sizes = [8, 32], strides = [1, 1]} : vector<8x128xf32> to vector<8x32xf32>
    %57 = arith.mulf %54, %35 : vector<8x32xf32>
    %58 = arith.mulf %53, %55 : vector<8x32xf32>
    %59 = arith.addf %57, %58 : vector<8x32xf32>
    %60 = math.tanh %59 : vector<8x32xf32>
    %61 = arith.mulf %56, %60 : vector<8x32xf32>
    %62 = arith.index_cast %41 : i32 to index
    %c0_19 = arith.constant 0 : index
    %63 = vector.load %arg8[%62, %c0_19] : memref<32x32xf32, #tpu.memory_space<vmem>>, vector<8x32xf32>
    tpu.vector_store %arg8[%62, %c0_19], %61 {strides = array<i32>} : memref<32x32xf32, #tpu.memory_space<vmem>>, vector<8x32xf32>,
    %c2_i32 = arith.constant 2 : i32
    %c8_i32_20 = arith.constant 8 : i32
    %64 = arith.muli %c2_i32, %c8_i32_20 : i32
    %65 = tpu.assume_multiple %64, 8 : i32
    %66 = arith.index_cast %65 : i32 to index
    %c0_21 = arith.constant 0 : index
    %67 = vector.load %arg7[%66, %c0_21] : memref<32x128xf32, #tpu.memory_space<vmem>>, vector<8x128xf32>
    %cst_22 = arith.constant dense<0.000000e+00> : vector<8x128xf32>
    %68 = tpu.matmul %61, %7, %cst_22 {dimension_numbers = #tpu.dot_dimension_numbers<[1], [0], [0], [1], [0, 0, 1, 1], [], []>} : vector<8x32xf32>, vector<32x128xf32>, vector<8x128xf32> -> vector<8x128xf32>
    %69 = arith.addf %67, %68 : vector<8x128xf32>
    %70 = math.tanh %69 : vector<8x128xf32>
    %71 = arith.negf %69 : vector<8x128xf32>
    %72 = math.exp %71 : vector<8x128xf32>
    %cst_23 = arith.constant 1.000000e+00 : f32
    %73 = vector.broadcast %cst_23 : f32 to vector<8x128xf32>
    %74 = arith.addf %73, %72 : vector<8x128xf32>
    %75 = arith.divf %73, %74 : vector<8x128xf32>
    %76 = arith.select %13, %70, %75 : vector<8x128xi1>, vector<8x128xf32>
    %77 = vector.extract_strided_slice %76 {offsets = [0, 0], sizes = [8, 32], strides = [1, 1]} : vector<8x128xf32> to vector<8x32xf32>
    %78 = vector.extract_strided_slice %76 {offsets = [0, 32], sizes = [8, 32], strides = [1, 1]} : vector<8x128xf32> to vector<8x32xf32>
    %79 = vector.extract_strided_slice %76 {offsets = [0, 64], sizes = [8, 32], strides = [1, 1]} : vector<8x128xf32> to vector<8x32xf32>
    %80 = vector.extract_strided_slice %76 {offsets = [0, 96], sizes = [8, 32], strides = [1, 1]} : vector<8x128xf32> to vector<8x32xf32>
    %81 = arith.mulf %78, %59 : vector<8x32xf32>
    %82 = arith.mulf %77, %79 : vector<8x32xf32>
    %83 = arith.addf %81, %82 : vector<8x32xf32>
    %84 = math.tanh %83 : vector<8x32xf32>
    %85 = arith.mulf %80, %84 : vector<8x32xf32>
    %86 = arith.index_cast %65 : i32 to index
    %c0_24 = arith.constant 0 : index
    %87 = vector.load %arg8[%86, %c0_24] : memref<32x32xf32, #tpu.memory_space<vmem>>, vector<8x32xf32>
    tpu.vector_store %arg8[%86, %c0_24], %85 {strides = array<i32>} : memref<32x32xf32, #tpu.memory_space<vmem>>, vector<8x32xf32>,
    %c3_i32 = arith.constant 3 : i32
    %c8_i32_25 = arith.constant 8 : i32
    %88 = arith.muli %c3_i32, %c8_i32_25 : i32
    %89 = tpu.assume_multiple %88, 8 : i32
    %90 = arith.index_cast %89 : i32 to index
    %c0_26 = arith.constant 0 : index
    %91 = vector.load %arg7[%90, %c0_26] : memref<32x128xf32, #tpu.memory_space<vmem>>, vector<8x128xf32>
    %cst_27 = arith.constant dense<0.000000e+00> : vector<8x128xf32>
    %92 = tpu.matmul %85, %7, %cst_27 {dimension_numbers = #tpu.dot_dimension_numbers<[1], [0], [0], [1], [0, 0, 1, 1], [], []>} : vector<8x32xf32>, vector<32x128xf32>, vector<8x128xf32> -> vector<8x128xf32>
    %93 = arith.addf %91, %92 : vector<8x128xf32>
    %94 = math.tanh %93 : vector<8x128xf32>
    %95 = arith.negf %93 : vector<8x128xf32>
    %96 = math.exp %95 : vector<8x128xf32>
    %cst_28 = arith.constant 1.000000e+00 : f32
    %97 = vector.broadcast %cst_28 : f32 to vector<8x128xf32>
    %98 = arith.addf %97, %96 : vector<8x128xf32>
    %99 = arith.divf %97, %98 : vector<8x128xf32>
    %100 = arith.select %13, %94, %99 : vector<8x128xi1>, vector<8x128xf32>
    %101 = vector.extract_strided_slice %100 {offsets = [0, 0], sizes = [8, 32], strides = [1, 1]} : vector<8x128xf32> to vector<8x32xf32>
    %102 = vector.extract_strided_slice %100 {offsets = [0, 32], sizes = [8, 32], strides = [1, 1]} : vector<8x128xf32> to vector<8x32xf32>
    %103 = vector.extract_strided_slice %100 {offsets = [0, 64], sizes = [8, 32], strides = [1, 1]} : vector<8x128xf32> to vector<8x32xf32>
    %104 = vector.extract_strided_slice %100 {offsets = [0, 96], sizes = [8, 32], strides = [1, 1]} : vector<8x128xf32> to vector<8x32xf32>
    %105 = arith.mulf %102, %83 : vector<8x32xf32>
    %106 = arith.mulf %101, %103 : vector<8x32xf32>
    %107 = arith.addf %105, %106 : vector<8x32xf32>
    %108 = math.tanh %107 : vector<8x32xf32>
    %109 = arith.mulf %104, %108 : vector<8x32xf32>
    %110 = arith.index_cast %89 : i32 to index
    %c0_29 = arith.constant 0 : index
    %111 = vector.load %arg8[%110, %c0_29] : memref<32x32xf32, #tpu.memory_space<vmem>>, vector<8x32xf32>
    tpu.vector_store %arg8[%110, %c0_29], %109 {strides = array<i32>} : memref<32x32xf32, #tpu.memory_space<vmem>>, vector<8x32xf32>,
    %c4_i32 = arith.constant 4 : i32
    %c0_30 = arith.constant 0 : index
    %c0_31 = arith.constant 0 : index
    %112 = vector.load %arg8[%c0_30, %c0_31] : memref<32x32xf32, #tpu.memory_space<vmem>>, vector<32x32xf32>
    %c0_32 = arith.constant 0 : index
    %c0_33 = arith.constant 0 : index
    %113 = vector.load %arg4[%c0_32, %c0_33] : memref<32x128xf32, #tpu.memory_space<vmem>>, vector<32x128xf32>
    %cst_34 = arith.constant dense<0.000000e+00> : vector<32x128xf32>
    %114 = tpu.matmul %112, %113, %cst_34 {dimension_numbers = #tpu.dot_dimension_numbers<[1], [0], [0], [1], [0, 0, 1, 1], [], []>} : vector<32x32xf32>, vector<32x128xf32>, vector<32x128xf32> -> vector<32x128xf32>
    %c0_35 = arith.constant 0 : index
    %c0_36 = arith.constant 0 : index
    %115 = vector.load %arg5[%c0_35, %c0_36] : memref<1x128xf32, #tpu.memory_space<vmem>>, vector<1x128xf32>
    %116 = vector.broadcast %115 : vector<1x128xf32> to vector<32x128xf32>
    %117 = arith.addf %114, %116 : vector<32x128xf32>
    %cst_37 = arith.constant dense<0xFF800000> : vector<32xf32>
    %118 = vector.multi_reduction <maximumf>, %117, %cst_37 [1] : vector<32x128xf32> to vector<32xf32>
    %119 = vector.shape_cast %118 : vector<32xf32> to vector<32x1xf32>
    %120 = vector.broadcast %119 : vector<32x1xf32> to vector<32x128xf32>
    %121 = arith.subf %117, %120 : vector<32x128xf32>
    %122 = math.exp %121 : vector<32x128xf32>
    %cst_38 = arith.constant dense<0.000000e+00> : vector<32xf32>
    %123 = vector.multi_reduction <add>, %122, %cst_38 [1] : vector<32x128xf32> to vector<32xf32>
    %124 = vector.shape_cast %123 : vector<32xf32> to vector<32x1xf32>
    %125 = tpu.reciprocal %124 : vector<32x1xf32> -> vector<32x1xf32>
    %126 = vector.broadcast %125 : vector<32x1xf32> to vector<32x128xf32>
    %127 = arith.mulf %122, %126 : vector<32x128xf32>
    %c0_39 = arith.constant 0 : index
    %c0_40 = arith.constant 0 : index
    %128 = vector.load %arg6[%c0_39, %c0_40] : memref<32x128xf32, #tpu.memory_space<vmem>>, vector<32x128xf32>
    tpu.vector_store %arg6[%c0_39, %c0_40], %127 {strides = array<i32>} : memref<32x128xf32, #tpu.memory_space<vmem>>, vector<32x128xf32>,
    return
  }
}

</mosaic_0001>

<llo_original>
// kernel: tpu_custom_call.1
$region0: #{tpu_custom_call.1}
  #allocation0 [shape = 'u32[]', space=smem, size = 0x4, offset = 0x4, fixed_abs, tag = 'smem constant byte address 0x4 - core index']
  #allocation1 [shape = 'u32[72,128]{1,0:T(1,128)}', space=vmem, size = 0x9000, scoped, tag = 'internal scratch']
  #allocation2 [shape = 'f32[32,128]{1,0:T(8,128)}', space=vmem, size = 0x4000, scoped, tag = 'scratch operand']
  #allocation3 [shape = 'f32[32,32]{1,0:T(8,128)}', space=vmem, size = 0x4000, scoped, tag = 'scratch operand']
  %s0 = inlined_call_operand.hbm [shape: f32[32,32], index: 0, kind: input, shape index: {}]
  %s1 = inlined_call_operand.hbm [shape: f32[32,128], index: 1, kind: input, shape index: {}]
  %s2 = inlined_call_operand.vmem [shape: f32[1,128], index: 2, kind: input, shape index: {}]
  %s3 = inlined_call_operand.hbm [shape: f32[32,128], index: 3, kind: input, shape index: {}]
  %s4 = inlined_call_operand.hbm [shape: f32[32,128], index: 4, kind: input, shape index: {}]
  %s5 = inlined_call_operand.vmem [shape: f32[1,128], index: 5, kind: input, shape index: {}]
  %s6 = inlined_call_operand.hbm [shape: f32[32,128], index: 6, kind: output, shape index: {}]
  %s7 = sld [smem:[#allocation0]]
  $region50: #{tpu_custom_call.1} parent=0
    _
  %s9 = ssub.s32 1, %s7
  %s10 = scalar_select 0, %s9, %s7
  $region1: #{tpu_custom_call.1} parent=0
    #allocation4 [shape = 'u8[16384]{0}', space=vmem, size = 0x4000, scoped, tag = 'input window, operand 0, single buffered']
    #allocation5 [shape = 's32[1]{0}', space=sflag, size = 0x4, scoped, tag = 'scoped memory for tpu_custom_call.1']
    #allocation6 [shape = 's32[1]{0}', space=sflag, size = 0x4, scoped, tag = 'scoped memory for tpu_custom_call.1']
    #allocation7 [shape = 'u8[16384]{0}', space=vmem, size = 0x4000, scoped, tag = 'input window, operand 1, single buffered']
    #allocation8 [shape = 's32[1]{0}', space=sflag, size = 0x4, scoped, tag = 'scoped memory for tpu_custom_call.1']
    #allocation9 [shape = 'u8[16384]{0}', space=vmem, size = 0x4000, scoped, tag = 'input window, operand 3, single buffered']
    #allocation10 [shape = 'u8[16384]{0}', space=vmem, size = 0x4000, scoped, tag = 'input window, operand 4, single buffered']
    #allocation11 [shape = 's32[1]{0}', space=sflag, size = 0x4, scoped, tag = 'scoped memory for tpu_custom_call.1']
    #allocation12 [shape = 'u8[16384]{0}', space=vmem, size = 0x4000, scoped, tag = 'output window, operand 0, single buffered']
    %11 = vsyncpa [#allocation5], 0
    %12 = vsyncpa [#allocation8], 0
    %13 = vsyncpa [#allocation11], 0
    %14 = vsyncpa [#allocation6], 0
    // Predicated region
    $region2: #{tpu_custom_call.1} parent=1 // pred_check
      _
    $region3: #{tpu_custom_call.1} parent=1 // pred_check_branch
      %16 = sbr.rel (0) target = $region5
    $region4: #{tpu_custom_call.1} parent=1 // pred_region
      %18 = vsyncadd [#allocation5], 0
      %s19 = sshll.u32 %s0, 4
      %s20 = int_to_ptr.hbm [resolvable:$true] %s19
      %s21 = sshll.u32 [#allocation4], 4
      %s22 = int_to_ptr.vmem [resolvable:$true] %s21
      %27 = dma.hbm_to_vmem [thread:$0]  %s20, 512, %s22, [#allocation5], 128, 128, 8
    $region5: #{tpu_custom_call.1} parent=1 // pred_fallthru
      _
    // Predicated region
    $region6: #{tpu_custom_call.1} parent=1 // pred_check
      _
    $region7: #{tpu_custom_call.1} parent=1 // pred_check_branch
      %29 = sbr.rel (0) target = $region9
    $region8: #{tpu_custom_call.1} parent=1 // pred_region
      %31 = vsyncadd [#allocation8], 0
      %s32 = sshll.u32 %s1, 4
      %s33 = int_to_ptr.hbm [resolvable:$true] %s32
      %s34 = sshll.u32 [#allocation7], 4
      %s35 = int_to_ptr.vmem [resolvable:$true] %s34
      %40 = dma.hbm_to_vmem [thread:$0]  %s33, 512, %s35, [#allocation8], 128, 128, 8
    $region9: #{tpu_custom_call.1} parent=1 // pred_fallthru
      _
    // Predicated region
    $region10: #{tpu_custom_call.1} parent=1 // pred_check
      _
    $region11: #{tpu_custom_call.1} parent=1 // pred_check_branch
      %42 = sbr.rel (0) target = $region13
    $region12: #{tpu_custom_call.1} parent=1 // pred_region
      _
    $region13: #{tpu_custom_call.1} parent=1 // pred_fallthru
      _
    // Predicated region
    $region14: #{tpu_custom_call.1} parent=1 // pred_check
      _
    $region15: #{tpu_custom_call.1} parent=1 // pred_check_branch
      %44 = sbr.rel (0) target = $region17
    $region16: #{tpu_custom_call.1} parent=1 // pred_region
      %46 = vsyncadd [#allocation8], 0
      %s47 = sshll.u32 %s3, 4
      %s48 = int_to_ptr.hbm [resolvable:$true] %s47
      %s49 = sshll.u32 [#allocation9], 4
      %s50 = int_to_ptr.vmem [resolvable:$true] %s49
      %55 = dma.hbm_to_vmem [thread:$0]  %s48, 512, %s50, [#allocation8], 128, 128, 8
    $region17: #{tpu_custom_call.1} parent=1 // pred_fallthru
      _
    // Predicated region
    $region18: #{tpu_custom_call.1} parent=1 // pred_check
      _
    $region19: #{tpu_custom_call.1} parent=1 // pred_check_branch
      %57 = sbr.rel (0) target = $region21
    $region20: #{tpu_custom_call.1} parent=1 // pred_region
      %59 = vsyncadd [#allocation11], 0
      %s60 = sshll.u32 %s4, 4
      %s61 = int_to_ptr.hbm [resolvable:$true] %s60
      %s62 = sshll.u32 [#allocation10], 4
      %s63 = int_to_ptr.vmem [resolvable:$true] %s62
      %68 = dma.hbm_to_vmem [thread:$0]  %s61, 512, %s63, [#allocation11], 128, 128, 8
    $region21: #{tpu_custom_call.1} parent=1 // pred_fallthru
      _
    // Predicated region
    $region22: #{tpu_custom_call.1} parent=1 // pred_check
      _
    $region23: #{tpu_custom_call.1} parent=1 // pred_check_branch
      %70 = sbr.rel (0) target = $region25
    $region24: #{tpu_custom_call.1} parent=1 // pred_region
      _
    $region25: #{tpu_custom_call.1} parent=1 // pred_fallthru
      _
    // Predicated region
    $region26: #{tpu_custom_call.1} parent=1 // pred_check
      _
    $region27: #{tpu_custom_call.1} parent=1 // pred_check_branch
      %72 = sbr.rel (0) target = $region29
    $region28: #{tpu_custom_call.1} parent=1 // pred_region
      %74 = dma.done [#allocation5], 512
    $region29: #{tpu_custom_call.1} parent=1 // pred_fallthru
      _
    // Predicated region
    $region30: #{tpu_custom_call.1} parent=1 // pred_check
      _
    $region31: #{tpu_custom_call.1} parent=1 // pred_check_branch
      %76 = sbr.rel (0) target = $region33
    $region32: #{tpu_custom_call.1} parent=1 // pred_region
      %78 = dma.done [#allocation8], 512
    $region33: #{tpu_custom_call.1} parent=1 // pred_fallthru
      _
    // Predicated region
    $region34: #{tpu_custom_call.1} parent=1 // pred_check
      _
    $region35: #{tpu_custom_call.1} parent=1 // pred_check_branch
      %80 = sbr.rel (0) target = $region37
    $region36: #{tpu_custom_call.1} parent=1 // pred_region
      %82 = dma.done [#allocation8], 512
    $region37: #{tpu_custom_call.1} parent=1 // pred_fallthru
      _
    // Predicated region
    $region38: #{tpu_custom_call.1} parent=1 // pred_check
      _
    $region39: #{tpu_custom_call.1} parent=1 // pred_check_branch
      %84 = sbr.rel (0) target = $region41
    $region40: #{tpu_custom_call.1} parent=1 // pred_region
      %86 = dma.done [#allocation11], 512
    $region41: #{tpu_custom_call.1} parent=1 // pred_fallthru
      _
    %v87 = vld [vmem:[#allocation4] sm:$0xff]
    %v88 = vld [vmem:[#allocation4 + $0x8] sm:$0xff]
    %v89 = vld [vmem:[#allocation4 + $0x10] sm:$0xff]
    %v90 = vld [vmem:[#allocation4 + $0x18] sm:$0xff]
    %v91 = vld [vmem:[#allocation7] sm:$0xff]
    %v92 = vld [vmem:[#allocation7 + $0x8] sm:$0xff]
    %v93 = vld [vmem:[#allocation7 + $0x10] sm:$0xff]
    %v94 = vld [vmem:[#allocation7 + $0x18] sm:$0xff]
    %v95 = vld [vmem:[%s2] sm:$0x1]
    %v97 = vperm.slane %v95, 0
    %vm99 = vcmask 261120
    %v101 = vsel %vm99, %v87, 0
    %v104 = vsel %vm99, %v88, 0
    %v107 = vsel %vm99, %v89, 0
    %v110 = vsel %vm99, %v90, 0
    %112 = vmatpush.msra.mxu0 0.0
    %113 = vmatpush.msra.mxu0 0.0
    %114 = vmatpush.msra.mxu0 0.0
    %115 = vmatpush.msra.mxu0 0.0
    %116 = vmatpush.msra.mxu0 0.0
    %117 = vmatpush.msra.mxu0 0.0
    %118 = vmatpush.msra.mxu0 0.0
    %119 = vmatpush.msra.mxu0 0.0
    %120 = vmatpush.msra.mxu0 0.0
    %121 = vmatpush.msra.mxu0 0.0
    %122 = vmatpush.msra.mxu0 0.0
    %123 = vmatpush.msra.mxu0 0.0
    %124 = vmatpush.msra.mxu0 %v94
    %125 = vmatpush.msra.mxu0 %v93
    %126 = vmatpush.msra.mxu0 %v92
    %127 = vmatpush.msra.mxu0 %v91
    %128 = vmatmul.f32.gmra.mxu0 %v101
    %v129 = vpop.f32.mrf.mxu0
    %v130 = vadd.f32 %v97, %v129
    %131 = vmatmul.f32.gmra.mxu0 %v104
    %v132 = vpop.f32.mrf.mxu0
    %v133 = vadd.f32 %v97, %v132
    %134 = vmatmul.f32.gmra.mxu0 %v107
    %v135 = vpop.f32.mrf.mxu0
    %v136 = vadd.f32 %v97, %v135
    %137 = vmatmul.f32.gmra.mxu0 %v110
    %v138 = vpop.f32.mrf.mxu0
    %v139 = vadd.f32 %v97, %v138
    %140 = vdwg.mxu0
    %141 = vst [vmem:[#allocation2] sm:$0xff] %v130
    %142 = vst [vmem:[#allocation2 + $0x8] sm:$0xff] %v133
    %143 = vst [vmem:[#allocation2 + $0x10] sm:$0xff] %v136
    %144 = vst [vmem:[#allocation2 + $0x18] sm:$0xff] %v139
    %v145 = vld [vmem:[#allocation9] sm:$0xff]
    %v146 = vld [vmem:[#allocation9 + $0x8] sm:$0xff]
    %v147 = vld [vmem:[#allocation9 + $0x10] sm:$0xff]
    %v148 = vld [vmem:[#allocation9 + $0x18] sm:$0xff]
    %v149 = vlaneseq
    %v150 = vand.u32 %v149, 127
    %vm151 = vcmp.ge.s32.totalorder %v150, 64
    %vm152 = vcmp.lt.s32.totalorder %v150, 96
    %vm153 = vmand %vm151, %vm152
    %v154 = vld [vmem:[#allocation2] sm:$0xff]
    %v156 = vsel %vm99, 0.0, 0
    %158 = vmatpush.msra.mxu0 0.0
    %159 = vmatpush.msra.mxu0 0.0
    %160 = vmatpush.msra.mxu0 0.0
    %161 = vmatpush.msra.mxu0 0.0
    %162 = vmatpush.msra.mxu0 0.0
    %163 = vmatpush.msra.mxu0 0.0
    %164 = vmatpush.msra.mxu0 0.0
    %165 = vmatpush.msra.mxu0 0.0
    %166 = vmatpush.msra.mxu0 0.0
    %167 = vmatpush.msra.mxu0 0.0
    %168 = vmatpush.msra.mxu0 0.0
    %169 = vmatpush.msra.mxu0 0.0
    %170 = vmatpush.msra.mxu0 %v148
    %171 = vmatpush.msra.mxu0 %v147
    %172 = vmatpush.msra.mxu0 %v146
    %173 = vmatpush.msra.mxu0 %v145
    %174 = vmatmul.f32.gmra.mxu0 %v156
    %v175 = vpop.f32.mrf.mxu0
    %v176 = vadd.f32 0.0, %v175
    %177 = vdwg.mxu0
    %v178 = vadd.f32 %v154, %v176
    %v179 = vtanh.pop %v178
    %v180 = vxor.u32 %v178, 2147483648
    %v181 = vmul.f32 %v180, 1.442695
    %v182 = vpow.pop %v181
    %v183 = vadd.f32 %v182, 1.0
    %v184 = vrcp.pop %v183
    %v185 = vmul.f32 %v183, %v184
    %v186 = vsub.f32 1.0, %v185
    %v187 = vmul.f32 %v184, %v186
    %v188 = vadd.f32 %v184, %v187
    %vm189 = vweird.f32 %v183
    %vm190 = vweird.f32 %v184
    %vm191 = vmor %vm189, %vm190
    %v192 = vsel %vm191, %v184, %v188
    %v193 = vand.u32 2147483647, %v183
    %vm194 = vcmp.eq.f32.partialorder %v193, 8.507059e+37
    %v195 = vand.u32 %v183, 2147483648
    %v196 = vor.u32 1.1754944e-38, %v195
    %v197 = vsel %vm194, %v196, %v192
    %v198 = vmul.f32 1.0, %v197
    %v199 = vsel %vm153, %v179, %v198
    %v200 = vmul.f32 %v199, 0.0
    %202 = vrot.lane.b32.xlu0 %v199, 64
    %v203 = vpop.permute.xlu0 %202
    %v205 = vmul.f32 %v199, %v203
    %207 = vrot.lane.b32.xlu0 %v205, 32
    %v208 = vpop.permute.xlu0 %207
    %v210 = vadd.f32 %v200, %v208
    %v211 = vtanh.pop %v210
    %213 = vrot.lane.b32.xlu0 %v211, 64
    %v214 = vpop.permute.xlu0 %213
    %v216 = vmul.f32 %v199, %v214
    %218 = vrot.lane.b32.xlu0 %v216, 32
    %v219 = vpop.permute.xlu0 %218
    %221 = vst.msk [vmem:[#allocation3] sm:$0xff] %vm99, %v219
    %s222 = scalar_lea.vmem [#allocation2], 8
    %v223 = vld [vmem:[%s222] sm:$0xff]
    %v224 = vsel %vm99, %v219, 0
    %226 = vmatpush.msra.mxu0 0.0
    %227 = vmatpush.msra.mxu0 0.0
    %228 = vmatpush.msra.mxu0 0.0
    %229 = vmatpush.msra.mxu0 0.0
    %230 = vmatpush.msra.mxu0 0.0
    %231 = vmatpush.msra.mxu0 0.0
    %232 = vmatpush.msra.mxu0 0.0
    %233 = vmatpush.msra.mxu0 0.0
    %234 = vmatpush.msra.mxu0 0.0
    %235 = vmatpush.msra.mxu0 0.0
    %236 = vmatpush.msra.mxu0 0.0
    %237 = vmatpush.msra.mxu0 0.0
    %238 = vmatpush.msra.mxu0 %v148
    %239 = vmatpush.msra.mxu0 %v147
    %240 = vmatpush.msra.mxu0 %v146
    %241 = vmatpush.msra.mxu0 %v145
    %242 = vmatmul.f32.gmra.mxu0 %v224
    %v243 = vpop.f32.mrf.mxu0
    %v244 = vadd.f32 0.0, %v243
    %245 = vdwg.mxu0
    %v246 = vadd.f32 %v223, %v244
    %v247 = vtanh.pop %v246
    %v248 = vxor.u32 %v246, 2147483648
    %v249 = vmul.f32 %v248, 1.442695
    %v250 = vpow.pop %v249
    %v251 = vadd.f32 %v250, 1.0
    %v252 = vrcp.pop %v251
    %v253 = vmul.f32 %v251, %v252
    %v254 = vsub.f32 1.0, %v253
    %v255 = vmul.f32 %v252, %v254
    %v256 = vadd.f32 %v252, %v255
    %vm257 = vweird.f32 %v251
    %vm258 = vweird.f32 %v252
    %vm259 = vmor %vm257, %vm258
    %v260 = vsel %vm259, %v252, %v256
    %v261 = vand.u32 2147483647, %v251
    %vm262 = vcmp.eq.f32.partialorder %v261, 8.507059e+37
    %v263 = vand.u32 %v251, 2147483648
    %v264 = vor.u32 1.1754944e-38, %v263
    %v265 = vsel %vm262, %v264, %v260
    %v266 = vmul.f32 1.0, %v265
    %v267 = vsel %vm153, %v247, %v266
    %v268 = vmul.f32 %v267, %v210
    %270 = vrot.lane.b32.xlu0 %v267, 64
    %v271 = vpop.permute.xlu0 %270
    %v273 = vmul.f32 %v267, %v271
    %275 = vrot.lane.b32.xlu0 %v273, 32
    %v276 = vpop.permute.xlu0 %275
    %v278 = vadd.f32 %v268, %v276
    %v279 = vtanh.pop %v278
    %281 = vrot.lane.b32.xlu0 %v279, 64
    %v282 = vpop.permute.xlu0 %281
    %v284 = vmul.f32 %v267, %v282
    %286 = vrot.lane.b32.xlu0 %v284, 32
    %v287 = vpop.permute.xlu0 %286
    %s289 = scalar_lea.vmem [#allocation3], 8
    %290 = vst.msk [vmem:[%s289] sm:$0xff] %vm99, %v287
    %s291 = scalar_lea.vmem [#allocation2], 16
    %v292 = vld [vmem:[%s291] sm:$0xff]
    %v293 = vsel %vm99, %v287, 0
    %295 = vmatpush.msra.mxu0 0.0
    %296 = vmatpush.msra.mxu0 0.0
    %297 = vmatpush.msra.mxu0 0.0
    %298 = vmatpush.msra.mxu0 0.0
    %299 = vmatpush.msra.mxu0 0.0
    %300 = vmatpush.msra.mxu0 0.0
    %301 = vmatpush.msra.mxu0 0.0
    %302 = vmatpush.msra.mxu0 0.0
    %303 = vmatpush.msra.mxu0 0.0
    %304 = vmatpush.msra.mxu0 0.0
    %305 = vmatpush.msra.mxu0 0.0
    %306 = vmatpush.msra.mxu0 0.0
    %307 = vmatpush.msra.mxu0 %v148
    %308 = vmatpush.msra.mxu0 %v147
    %309 = vmatpush.msra.mxu0 %v146
    %310 = vmatpush.msra.mxu0 %v145
    %311 = vmatmul.f32.gmra.mxu0 %v293
    %v312 = vpop.f32.mrf.mxu0
    %v313 = vadd.f32 0.0, %v312
    %314 = vdwg.mxu0
    %v315 = vadd.f32 %v292, %v313
    %v316 = vtanh.pop %v315
    %v317 = vxor.u32 %v315, 2147483648
    %v318 = vmul.f32 %v317, 1.442695
    %v319 = vpow.pop %v318
    %v320 = vadd.f32 %v319, 1.0
    %v321 = vrcp.pop %v320
    %v322 = vmul.f32 %v320, %v321
    %v323 = vsub.f32 1.0, %v322
    %v324 = vmul.f32 %v321, %v323
    %v325 = vadd.f32 %v321, %v324
    %vm326 = vweird.f32 %v320
    %vm327 = vweird.f32 %v321
    %vm328 = vmor %vm326, %vm327
    %v329 = vsel %vm328, %v321, %v325
    %v330 = vand.u32 2147483647, %v320
    %vm331 = vcmp.eq.f32.partialorder %v330, 8.507059e+37
    %v332 = vand.u32 %v320, 2147483648
    %v333 = vor.u32 1.1754944e-38, %v332
    %v334 = vsel %vm331, %v333, %v329
    %v335 = vmul.f32 1.0, %v334
    %v336 = vsel %vm153, %v316, %v335
    %v337 = vmul.f32 %v336, %v278
    %339 = vrot.lane.b32.xlu0 %v336, 64
    %v340 = vpop.permute.xlu0 %339
    %v342 = vmul.f32 %v336, %v340
    %344 = vrot.lane.b32.xlu0 %v342, 32
    %v345 = vpop.permute.xlu0 %344
    %v347 = vadd.f32 %v337, %v345
    %v348 = vtanh.pop %v347
    %350 = vrot.lane.b32.xlu0 %v348, 64
    %v351 = vpop.permute.xlu0 %350
    %v353 = vmul.f32 %v336, %v351
    %355 = vrot.lane.b32.xlu0 %v353, 32
    %v356 = vpop.permute.xlu0 %355
    %s358 = scalar_lea.vmem [#allocation3], 16
    %359 = vst.msk [vmem:[%s358] sm:$0xff] %vm99, %v356
    %s360 = scalar_lea.vmem [#allocation2], 24
    %v361 = vld [vmem:[%s360] sm:$0xff]
    %v362 = vsel %vm99, %v356, 0
    %364 = vmatpush.msra.mxu0 0.0
    %365 = vmatpush.msra.mxu0 0.0
    %366 = vmatpush.msra.mxu0 0.0
    %367 = vmatpush.msra.mxu0 0.0
    %368 = vmatpush.msra.mxu0 0.0
    %369 = vmatpush.msra.mxu0 0.0
    %370 = vmatpush.msra.mxu0 0.0
    %371 = vmatpush.msra.mxu0 0.0
    %372 = vmatpush.msra.mxu0 0.0
    %373 = vmatpush.msra.mxu0 0.0
    %374 = vmatpush.msra.mxu0 0.0
    %375 = vmatpush.msra.mxu0 0.0
    %376 = vmatpush.msra.mxu0 %v148
    %377 = vmatpush.msra.mxu0 %v147
    %378 = vmatpush.msra.mxu0 %v146
    %379 = vmatpush.msra.mxu0 %v145
    %380 = vmatmul.f32.gmra.mxu0 %v362
    %v381 = vpop.f32.mrf.mxu0
    %v382 = vadd.f32 0.0, %v381
    %383 = vdwg.mxu0
    %v384 = vadd.f32 %v361, %v382
    %v385 = vtanh.pop %v384
    %v386 = vxor.u32 %v384, 2147483648
    %v387 = vmul.f32 %v386, 1.442695
    %v388 = vpow.pop %v387
    %v389 = vadd.f32 %v388, 1.0
    %v390 = vrcp.pop %v389
    %v391 = vmul.f32 %v389, %v390
    %v392 = vsub.f32 1.0, %v391
    %v393 = vmul.f32 %v390, %v392
    %v394 = vadd.f32 %v390, %v393
    %vm395 = vweird.f32 %v389
    %vm396 = vweird.f32 %v390
    %vm397 = vmor %vm395, %vm396
    %v398 = vsel %vm397, %v390, %v394
    %v399 = vand.u32 2147483647, %v389
    %vm400 = vcmp.eq.f32.partialorder %v399, 8.507059e+37
    %v401 = vand.u32 %v389, 2147483648
    %v402 = vor.u32 1.1754944e-38, %v401
    %v403 = vsel %vm400, %v402, %v398
    %v404 = vmul.f32 1.0, %v403
    %v405 = vsel %vm153, %v385, %v404
    %v406 = vmul.f32 %v405, %v347
    %408 = vrot.lane.b32.xlu0 %v405, 64
    %v409 = vpop.permute.xlu0 %408
    %v411 = vmul.f32 %v405, %v409
    %413 = vrot.lane.b32.xlu0 %v411, 32
    %v414 = vpop.permute.xlu0 %413
    %v416 = vadd.f32 %v406, %v414
    %v417 = vtanh.pop %v416
    %419 = vrot.lane.b32.xlu0 %v417, 64
    %v420 = vpop.permute.xlu0 %419
    %v422 = vmul.f32 %v405, %v420
    %424 = vrot.lane.b32.xlu0 %v422, 32
    %v425 = vpop.permute.xlu0 %424
    %s427 = scalar_lea.vmem [#allocation3], 24
    %428 = vst.msk [vmem:[%s427] sm:$0xff] %vm99, %v425
    %v429 = vld [vmem:[#allocation3] sm:$0xff]
    %v430 = vld [vmem:[#allocation3 + $0x8] sm:$0xff]
    %v431 = vld [vmem:[#allocation3 + $0x10] sm:$0xff]
    %v432 = vld [vmem:[#allocation3 + $0x18] sm:$0xff]
    %v433 = vld [vmem:[#allocation10] sm:$0xff]
    %v434 = vld [vmem:[#allocation10 + $0x8] sm:$0xff]
    %v435 = vld [vmem:[#allocation10 + $0x10] sm:$0xff]
    %v436 = vld [vmem:[#allocation10 + $0x18] sm:$0xff]
    %v437 = vld [vmem:[%s5] sm:$0x1]
    %v439 = vperm.slane %v437, 0
    %v442 = vsel %vm99, %v429, 0
    %v445 = vsel %vm99, %v430, 0
    %v448 = vsel %vm99, %v431, 0
    %v451 = vsel %vm99, %v432, 0
    %453 = vmatpush.msra.mxu0 0.0
    %454 = vmatpush.msra.mxu0 0.0
    %455 = vmatpush.msra.mxu0 0.0
    %456 = vmatpush.msra.mxu0 0.0
    %457 = vmatpush.msra.mxu0 0.0
    %458 = vmatpush.msra.mxu0 0.0
    %459 = vmatpush.msra.mxu0 0.0
    %460 = vmatpush.msra.mxu0 0.0
    %461 = vmatpush.msra.mxu0 0.0
    %462 = vmatpush.msra.mxu0 0.0
    %463 = vmatpush.msra.mxu0 0.0
    %464 = vmatpush.msra.mxu0 0.0
    %465 = vmatpush.msra.mxu0 %v436
    %466 = vmatpush.msra.mxu0 %v435
    %467 = vmatpush.msra.mxu0 %v434
    %468 = vmatpush.msra.mxu0 %v433
    %469 = vmatmul.f32.gmra.mxu0 %v442
    %v470 = vpop.f32.mrf.mxu0
    %v471 = vadd.f32 %v439, %v470
    %472 = vmatmul.f32.gmra.mxu0 %v445
    %v473 = vpop.f32.mrf.mxu0
    %v474 = vadd.f32 %v439, %v473
    %475 = vmatmul.f32.gmra.mxu0 %v448
    %v476 = vpop.f32.mrf.mxu0
    %v477 = vadd.f32 %v439, %v476
    %478 = vmatmul.f32.gmra.mxu0 %v451
    %v479 = vpop.f32.mrf.mxu0
    %v480 = vadd.f32 %v439, %v479
    %481 = vdwg.mxu0
    %482 = vmax.xlane.f32.xlu0 %v471
    %v483 = vpop.xlane.xlu0 %482
    %484 = vmax.xlane.f32.xlu0 %v474
    %v485 = vpop.xlane.xlu0 %484
    %486 = vmax.xlane.f32.xlu0 %v477
    %v487 = vpop.xlane.xlu0 %486
    %488 = vmax.xlane.f32.xlu0 %v480
    %v489 = vpop.xlane.xlu0 %488
    %v490 = vsub.f32 %v471, %v483
    %v491 = vsub.f32 %v474, %v485
    %v492 = vsub.f32 %v477, %v487
    %v493 = vsub.f32 %v480, %v489
    %v494 = vmul.f32 %v490, 1.442695
    %v495 = vpow.pop %v494
    %v496 = vmul.f32 %v491, 1.442695
    %v497 = vpow.pop %v496
    %v498 = vmul.f32 %v492, 1.442695
    %v499 = vpow.pop %v498
    %v500 = vmul.f32 %v493, 1.442695
    %v501 = vpow.pop %v500
    %502 = vadd.xlane.f32.xlu0 %v495
    %v503 = vpop.xlane.xlu0 %502
    %504 = vadd.xlane.f32.xlu0 %v497
    %v505 = vpop.xlane.xlu0 %504
    %506 = vadd.xlane.f32.xlu0 %v499
    %v507 = vpop.xlane.xlu0 %506
    %508 = vadd.xlane.f32.xlu0 %v501
    %v509 = vpop.xlane.xlu0 %508
    %v510 = vrcp.pop %v503
    %v511 = vmul.f32 %v503, %v510
    %v512 = vsub.f32 1.0, %v511
    %v513 = vmul.f32 %v510, %v512
    %v514 = vadd.f32 %v510, %v513
    %vm515 = vweird.f32 %v503
    %vm516 = vweird.f32 %v510
    %vm517 = vmor %vm515, %vm516
    %v518 = vsel %vm517, %v510, %v514
    %v519 = vand.u32 2147483647, %v503
    %vm520 = vcmp.eq.f32.partialorder %v519, 8.507059e+37
    %v521 = vand.u32 %v503, 2147483648
    %v522 = vor.u32 1.1754944e-38, %v521
    %v523 = vsel %vm520, %v522, %v518
    %v524 = vrcp.pop %v505
    %v525 = vmul.f32 %v505, %v524
    %v526 = vsub.f32 1.0, %v525
    %v527 = vmul.f32 %v524, %v526
    %v528 = vadd.f32 %v524, %v527
    %vm529 = vweird.f32 %v505
    %vm530 = vweird.f32 %v524
    %vm531 = vmor %vm529, %vm530
    %v532 = vsel %vm531, %v524, %v528
    %v533 = vand.u32 2147483647, %v505
    %vm534 = vcmp.eq.f32.partialorder %v533, 8.507059e+37
    %v535 = vand.u32 %v505, 2147483648
    %v536 = vor.u32 1.1754944e-38, %v535
    %v537 = vsel %vm534, %v536, %v532
    %v538 = vrcp.pop %v507
    %v539 = vmul.f32 %v507, %v538
    %v540 = vsub.f32 1.0, %v539
    %v541 = vmul.f32 %v538, %v540
    %v542 = vadd.f32 %v538, %v541
    %vm543 = vweird.f32 %v507
    %vm544 = vweird.f32 %v538
    %vm545 = vmor %vm543, %vm544
    %v546 = vsel %vm545, %v538, %v542
    %v547 = vand.u32 2147483647, %v507
    %vm548 = vcmp.eq.f32.partialorder %v547, 8.507059e+37
    %v549 = vand.u32 %v507, 2147483648
    %v550 = vor.u32 1.1754944e-38, %v549
    %v551 = vsel %vm548, %v550, %v546
    %v552 = vrcp.pop %v509
    %v553 = vmul.f32 %v509, %v552
    %v554 = vsub.f32 1.0, %v553
    %v555 = vmul.f32 %v552, %v554
    %v556 = vadd.f32 %v552, %v555
    %vm557 = vweird.f32 %v509
    %vm558 = vweird.f32 %v552
    %vm559 = vmor %vm557, %vm558
    %v560 = vsel %vm559, %v552, %v556
    %v561 = vand.u32 2147483647, %v509
    %vm562 = vcmp.eq.f32.partialorder %v561, 8.507059e+37
    %v563 = vand.u32 %v509, 2147483648
    %v564 = vor.u32 1.1754944e-38, %v563
    %v565 = vsel %vm562, %v564, %v560
    %v566 = vmul.f32 %v495, %v523
    %v567 = vmul.f32 %v497, %v537
    %v568 = vmul.f32 %v499, %v551
    %v569 = vmul.f32 %v501, %v565
    %570 = vst [vmem:[#allocation12] sm:$0xff] %v566
    %571 = vst [vmem:[#allocation12 + $0x8] sm:$0xff] %v567
    %572 = vst [vmem:[#allocation12 + $0x10] sm:$0xff] %v568
    %573 = vst [vmem:[#allocation12 + $0x18] sm:$0xff] %v569
    // Predicated region
    $region42: #{tpu_custom_call.1} parent=1 // pred_check
      _
    $region43: #{tpu_custom_call.1} parent=1 // pred_check_branch
      %575 = sbr.rel (0) target = $region45
    $region44: #{tpu_custom_call.1} parent=1 // pred_region
      %577 = vsyncadd [#allocation6], 0
      %s578 = sshll.u32 [#allocation12], 4
      %s579 = int_to_ptr.vmem [resolvable:$true] %s578
      %s580 = sshll.u32 %s6, 4
      %s581 = int_to_ptr.hbm [resolvable:$true] %s580
      %586 = dma.vmem_to_hbm [thread:$0]  %s579, 512, %s581, [#allocation6], 128, 128, 8
    $region45: #{tpu_custom_call.1} parent=1 // pred_fallthru
      _
    // Predicated region
    $region46: #{tpu_custom_call.1} parent=1 // pred_check
      _
    $region47: #{tpu_custom_call.1} parent=1 // pred_check_branch
      %588 = sbr.rel (0) target = $region49
    $region48: #{tpu_custom_call.1} parent=1 // pred_region
      %590 = dma.done [#allocation6], 512
    $region49: #{tpu_custom_call.1} parent=1 // pred_fallthru
      _
    %591 = vsyncpa [#allocation5], 1
    %592 = vsyncpa [#allocation8], 1
    %593 = vsyncpa [#allocation11], 1
    %594 = vsyncpa [#allocation6], 1

</llo_original>
